<compile_context>
chip_gen: v7x
topology: tpu7x:2x2x1
jax: 0.10.0
libtpu: 0.0.40
codegen_flags: <defaults>
</compile_context>

<pallas_src>
import functools

import jax
import jax.numpy as jnp
from jax.experimental import pallas as pl
from jax.experimental.pallas import tpu as pltpu


# ---------------------------------------------------------------------------
# Packed parameters.
#   wslab (128, 128) bf16:
#     rows   0: 64, cols 0:5   -> W1 (64, 5)
#     rows  64: 96, cols 0:64  -> W2 (32, 64)
#     rows  96:112, cols 0:32  -> W3 (16, 32)
#   bslab (64, 8) f32 (column vectors, features on sublanes):
#     col 0 rows 0:64 -> b1 ; col 1 rows 0:32 -> b2 ; col 2 rows 0:16 -> b3
#     col 3 rows 0:16 -> W4 (as a column, kept f32 for the VPU fc4 path)
#     col 4 row 0     -> b4
# Weights are stored in PyTorch (out_features, in_features) layout so the
# transposed compute is simply h = W @ x + b  with batch on the lane axis.
# ---------------------------------------------------------------------------
def pack_params(params):
    wslab = jnp.zeros((128, 128), jnp.bfloat16)
    wslab = wslab.at[0:64, 0:5].set(params["w1"].astype(jnp.bfloat16))
    wslab = wslab.at[64:96, 0:64].set(params["w2"].astype(jnp.bfloat16))
    wslab = wslab.at[96:112, 0:32].set(params["w3"].astype(jnp.bfloat16))

    bslab = jnp.zeros((64, 8), jnp.float32)
    bslab = bslab.at[0:64, 0].set(params["b1"])
    bslab = bslab.at[0:32, 1].set(params["b2"])
    bslab = bslab.at[0:16, 2].set(params["b3"])
    bslab = bslab.at[0:16, 3].set(params["w4"][0])   # (1,16) -> f32 column
    bslab = bslab.at[0, 4].set(params["b4"][0])
    return wslab, bslab


def mlp_kernel(x_ref, w_ref, b_ref, o_ref):
    f32, bf16 = jnp.float32, jnp.bfloat16

    x = x_ref[...]                                    # bf16 (5, TB), batch on lanes

    # fc1 + ReLU : (64,5) @ (5,TB) -> (64,TB); fuse bias+act+downcast.
    w1 = w_ref[0:64, 0:5]
    b1 = b_ref[0:64, 0:1]
    h1 = jnp.maximum(jnp.dot(w1, x, preferred_element_type=f32) + b1, 0.0)
    h1 = h1.astype(bf16)

    # fc2 + Tanh : (32,64) @ (64,TB) -> (32,TB)
    w2 = w_ref[64:96, 0:64]
    b2 = b_ref[0:32, 1:2]
    h2 = jnp.tanh(jnp.dot(w2, h1, preferred_element_type=f32) + b2)
    h2 = h2.astype(bf16)

    # fc3 + LeakyReLU(0.01) : (16,32) @ (32,TB) -> (16,TB), stays f32 for fc4.
    w3 = w_ref[96:112, 0:32]
    b3 = b_ref[0:16, 2:3]
    z3 = jnp.dot(w3, h2, preferred_element_type=f32) + b3
    h3 = jnp.where(z3 >= 0.0, z3, 0.01 * z3)

    # fc4 + Sigmoid : 1-wide output -> VPU multiply + sublane reduce (no MXU).
    w4 = b_ref[0:16, 3:4]                             # (16, 1) f32
    b4 = b_ref[0:1, 4:5]                              # (1, 1)  f32
    y = jnp.sum(w4 * h3, axis=0, keepdims=True) + b4  # (1, TB)
    o_ref[...] = jax.nn.sigmoid(y).astype(o_ref.dtype)


def _choose_tile(B, block_b):
    """Pick a lane tile TB (multiple of 128, <= block_b) aiming for >= 2 grid
    blocks when the batch is large enough (keeps both v7x TensorCores busy)."""
    lanes = 128 * pl.cdiv(B, 128)                       # batch rounded to lanes
    half = 128 * pl.cdiv(lanes // 128, 2)               # ~half the batch, lane-aligned
    TB = max(128, min(block_b, half))
    n_blocks = pl.cdiv(lanes, TB)
    return TB, n_blocks, n_blocks * TB


def neural_net_forward(x, wslab, bslab, *, block_b=16384):
    """x: (B, 5) float32. Returns (B, 1) float32."""
    B, F = x.shape
    assert F == 5, "NeuralNet expects 5 input features"

    TB, n_blocks, B_pad = _choose_tile(B, block_b)

    # Lane-dense bf16 transposed input (single fused transpose+cast[+pad] pass).
    if B_pad == B:
        xt = x.T.astype(jnp.bfloat16)
    else:
        xt = jnp.zeros((5, B_pad), jnp.bfloat16).at[:, :B].set(
            x.T.astype(jnp.bfloat16))

    # Advisory cost estimate for XLA's scheduler around the custom call.
    flops = 2 * (5 * 64 + 64 * 32 + 32 * 16 + 16 * 1) * B_pad
    transcendentals = 33 * B_pad                          # 32 tanh + 1 sigmoid
    bytes_accessed = (5 * 2 + 1 * 4) * B_pad + wslab.size * 2 + bslab.size * 4

    out_t = pl.pallas_call(
        mlp_kernel,
        out_shape=jax.ShapeDtypeStruct((1, B_pad), jnp.float32),
        grid=(n_blocks,),
        in_specs=[
            pl.BlockSpec((5, TB), lambda i: (0, i)),       # x tile, pipelined over batch
            pl.BlockSpec((128, 128), lambda i: (0, 0)),    # bf16 weight slab, resident
            pl.BlockSpec((64, 8), lambda i: (0, 0)),       # f32 bias/fc4 slab, resident
        ],
        out_specs=pl.BlockSpec((1, TB), lambda i: (0, i)),  # lane-dense output
        compiler_params=pltpu.CompilerParams(
            dimension_semantics=("parallel",),             # megacore / 2-TC sharding
            vmem_limit_bytes=32 * 1024 * 1024,             # safe on v5e/v6e/v7x
        ),
        cost_estimate=pl.CostEstimate(
            flops=flops,
            transcendentals=transcendentals,
            bytes_accessed=bytes_accessed,
        ),
    )(xt, wslab, bslab)

    return out_t[0, :B].reshape(B, 1)


def init_params(key):
    """PyTorch nn.Linear default init: U(-1/sqrt(fan_in), 1/sqrt(fan_in)).
    Weights stored in PyTorch (out_features, in_features) layout."""
    dims = [(5, 64), (64, 32), (32, 16), (16, 1)]
    params = {}
    keys = jax.random.split(key, 2 * len(dims))
    for i, (fan_in, fan_out) in enumerate(dims):
        bound = 1.0 / (fan_in ** 0.5)
        params[f"w{i + 1}"] = jax.random.uniform(
            keys[2 * i], (fan_out, fan_in), minval=-bound, maxval=bound,
            dtype=jnp.float32)
        params[f"b{i + 1}"] = jax.random.uniform(
            keys[2 * i + 1], (fan_out,), minval=-bound, maxval=bound,
            dtype=jnp.float32)
    return params


def reference_forward(x, p):
    """Pure-JAX f32 reference mirroring the PyTorch module."""
    h = jnp.maximum(x @ p["w1"].T + p["b1"], 0.0)
    h = jnp.tanh(h @ p["w2"].T + p["b2"])
    h = h @ p["w3"].T + p["b3"]
    h = jnp.where(h >= 0.0, h, 0.01 * h)
    return jax.nn.sigmoid(h @ p["w4"].T + p["b4"])


if __name__ == "__main__":
    key = jax.random.PRNGKey(0)
    k_params, k_x = jax.random.split(key)

    params = init_params(k_params)
    wslab, bslab = pack_params(params)

    B = 8
    x = jax.random.normal(k_x, (B, 5), dtype=jnp.float32)

    fwd = jax.jit(functools.partial(neural_net_forward))
    y = jax.block_until_ready(fwd(x, wslab, bslab))

    y_ref = reference_forward(x, params)
    assert y.shape == (B, 1)
    # bf16 MXU operands / bf16 input (f32 accumulate) vs. pure-f32 reference.
    assert jnp.allclose(y, y_ref, atol=2e-2, rtol=2e-2), "mismatch vs reference"

    print("KERNEL_OK")
</pallas_src>

<mosaic_0001>
module attributes {stable_mosaic.version = 11 : i64} {
  func.func @mlp_kernel(%arg0: i32, %arg1: memref<5x128xbf16, #tpu.memory_space<vmem>>, %arg2: memref<128x128xbf16, #tpu.memory_space<vmem>>, %arg3: memref<64x8xf32, #tpu.memory_space<vmem>>, %arg4: memref<1x128xf32, #tpu.memory_space<vmem>>) attributes {dimension_semantics = [#tpu.dimension_semantics<parallel>], iteration_bounds = array<i64: 1>, scalar_prefetch = 0 : i64, scratch_operands = 0 : i64, tpu.core_type = #tpu.core_type<tc>, window_params = [{transform_indices = @transform_0, window_bounds = array<i64: 5, 128>}, {pipeline_mode = #tpu.pipeline_mode<synchronous>, transform_indices = @transform_1, window_bounds = array<i64: 128, 128>}, {pipeline_mode = #tpu.pipeline_mode<synchronous>, transform_indices = @transform_2, window_bounds = array<i64: 64, 8>}, {transform_indices = @transform_3, window_bounds = array<i64: 1, 128>}]} {
    %c0 = arith.constant 0 : index
    %c0_0 = arith.constant 0 : index
    %0 = vector.load %arg1[%c0, %c0_0] : memref<5x128xbf16, #tpu.memory_space<vmem>>, vector<5x128xbf16>
    %c0_1 = arith.constant 0 : index
    %c0_2 = arith.constant 0 : index
    %1 = vector.load %arg2[%c0_1, %c0_2] : memref<128x128xbf16, #tpu.memory_space<vmem>>, vector<64x5xbf16>
    %c0_3 = arith.constant 0 : index
    %c0_4 = arith.constant 0 : index
    %2 = vector.load %arg3[%c0_3, %c0_4] : memref<64x8xf32, #tpu.memory_space<vmem>>, vector<64x1xf32>
    %cst = arith.constant dense<0.000000e+00> : vector<64x128xf32>
    %3 = tpu.matmul %1, %0, %cst {dimension_numbers = #tpu.dot_dimension_numbers<[1], [0], [0], [1], [0, 0, 1, 1], [], []>} : vector<64x5xbf16>, vector<5x128xbf16>, vector<64x128xf32> -> vector<64x128xf32>
    %4 = vector.broadcast %2 : vector<64x1xf32> to vector<64x128xf32>
    %5 = arith.addf %3, %4 : vector<64x128xf32>
    %cst_5 = arith.constant 0.000000e+00 : f32
    %6 = vector.broadcast %cst_5 : f32 to vector<64x128xf32>
    %7 = arith.maximumf %5, %6 : vector<64x128xf32>
    %8 = arith.truncf %7 : vector<64x128xf32> to vector<64x128xbf16>
    %c64 = arith.constant 64 : index
    %c0_6 = arith.constant 0 : index
    %9 = vector.load %arg2[%c64, %c0_6] : memref<128x128xbf16, #tpu.memory_space<vmem>>, vector<32x64xbf16>
    %c0_7 = arith.constant 0 : index
    %c1 = arith.constant 1 : index
    %10 = vector.load %arg3[%c0_7, %c1] : memref<64x8xf32, #tpu.memory_space<vmem>>, vector<32x1xf32>
    %cst_8 = arith.constant dense<0.000000e+00> : vector<32x128xf32>
    %11 = tpu.matmul %9, %8, %cst_8 {dimension_numbers = #tpu.dot_dimension_numbers<[1], [0], [0], [1], [0, 0, 1, 1], [], []>} : vector<32x64xbf16>, vector<64x128xbf16>, vector<32x128xf32> -> vector<32x128xf32>
    %12 = vector.broadcast %10 : vector<32x1xf32> to vector<32x128xf32>
    %13 = arith.addf %11, %12 : vector<32x128xf32>
    %14 = math.tanh %13 : vector<32x128xf32>
    %15 = arith.truncf %14 : vector<32x128xf32> to vector<32x128xbf16>
    %c96 = arith.constant 96 : index
    %c0_9 = arith.constant 0 : index
    %16 = vector.load %arg2[%c96, %c0_9] : memref<128x128xbf16, #tpu.memory_space<vmem>>, vector<16x32xbf16>
    %c0_10 = arith.constant 0 : index
    %c2 = arith.constant 2 : index
    %17 = vector.load %arg3[%c0_10, %c2] : memref<64x8xf32, #tpu.memory_space<vmem>>, vector<16x1xf32>
    %cst_11 = arith.constant dense<0.000000e+00> : vector<16x128xf32>
    %18 = tpu.matmul %16, %15, %cst_11 {dimension_numbers = #tpu.dot_dimension_numbers<[1], [0], [0], [1], [0, 0, 1, 1], [], []>} : vector<16x32xbf16>, vector<32x128xbf16>, vector<16x128xf32> -> vector<16x128xf32>
    %19 = vector.broadcast %17 : vector<16x1xf32> to vector<16x128xf32>
    %20 = arith.addf %18, %19 : vector<16x128xf32>
    %cst_12 = arith.constant 0.000000e+00 : f32
    %21 = vector.broadcast %cst_12 : f32 to vector<16x128xf32>
    %22 = arith.cmpf oge, %20, %21 : vector<16x128xf32>
    %cst_13 = arith.constant 0.00999999977 : f32
    %23 = vector.broadcast %cst_13 : f32 to vector<16x128xf32>
    %24 = arith.mulf %23, %20 : vector<16x128xf32>
    %25 = arith.select %22, %20, %24 : vector<16x128xi1>, vector<16x128xf32>
    %c0_14 = arith.constant 0 : index
    %c3 = arith.constant 3 : index
    %26 = vector.load %arg3[%c0_14, %c3] : memref<64x8xf32, #tpu.memory_space<vmem>>, vector<16x1xf32>
    %c0_15 = arith.constant 0 : index
    %c4 = arith.constant 4 : index
    %27 = vector.load %arg3[%c0_15, %c4] : memref<64x8xf32, #tpu.memory_space<vmem>>, vector<1x1xf32>
    %28 = vector.broadcast %26 : vector<16x1xf32> to vector<16x128xf32>
    %29 = arith.mulf %28, %25 : vector<16x128xf32>
    %cst_16 = arith.constant dense<0.000000e+00> : vector<128xf32>
    %30 = vector.multi_reduction <add>, %29, %cst_16 [0] : vector<16x128xf32> to vector<128xf32>
    %31 = vector.shape_cast %30 : vector<128xf32> to vector<1x128xf32>
    %32 = vector.broadcast %27 : vector<1x1xf32> to vector<1x128xf32>
    %33 = arith.addf %31, %32 : vector<1x128xf32>
    %34 = arith.negf %33 : vector<1x128xf32>
    %35 = math.exp %34 : vector<1x128xf32>
    %cst_17 = arith.constant 1.000000e+00 : f32
    %36 = vector.broadcast %cst_17 : f32 to vector<1x128xf32>
    %37 = arith.addf %36, %35 : vector<1x128xf32>
    %38 = arith.divf %36, %37 : vector<1x128xf32>
    %c0_18 = arith.constant 0 : index
    %c0_19 = arith.constant 0 : index
    %39 = vector.load %arg4[%c0_18, %c0_19] : memref<1x128xf32, #tpu.memory_space<vmem>>, vector<1x128xf32>
    tpu.vector_store %arg4[%c0_18, %c0_19], %38 {strides = array<i32>} : memref<1x128xf32, #tpu.memory_space<vmem>>, vector<1x128xf32>,
    return
  }
  func.func @transform_0(%arg0: i32) -> (i32, i32) {
    %c0_i32 = arith.constant 0 : i32
    %c0_i32_0 = arith.constant 0 : i32
    return %c0_i32, %arg0 : i32, i32
  }
  func.func @transform_1(%arg0: i32) -> (i32, i32) {
    %c0_i32 = arith.constant 0 : i32
    %c0_i32_0 = arith.constant 0 : i32
    %c0_i32_1 = arith.constant 0 : i32
    return %c0_i32, %c0_i32_0 : i32, i32
  }
  func.func @transform_2(%arg0: i32) -> (i32, i32) {
    %c0_i32 = arith.constant 0 : i32
    %c0_i32_0 = arith.constant 0 : i32
    %c0_i32_1 = arith.constant 0 : i32
    return %c0_i32, %c0_i32_0 : i32, i32
  }
  func.func @transform_3(%arg0: i32) -> (i32, i32) {
    %c0_i32 = arith.constant 0 : i32
    %c0_i32_0 = arith.constant 0 : i32
    return %c0_i32, %arg0 : i32, i32
  }
}

</mosaic_0001>

<llo_original>
// kernel: neural_net_forward.1
$region0: #{neural_net_forward.1}
  #allocation0 [shape = 'u32[]', space=smem, size = 0x4, offset = 0x4, fixed_abs, tag = 'smem constant byte address 0x4 - core index']
  #allocation1 [shape = 'u32[144,128]{1,0:T(1,128)}', space=vmem, size = 0x12000, scoped, tag = 'internal scratch']
  %s0 = inlined_call_operand.vmem [shape: bf16[5,128], index: 0, kind: input, shape index: {}]
  %s1 = inlined_call_operand.vmem [shape: bf16[128,128], index: 1, kind: input, shape index: {}]
  %s2 = inlined_call_operand.vmem [shape: f32[64,8], index: 2, kind: input, shape index: {}]
  %s3 = inlined_call_operand.vmem [shape: f32[1,128], index: 3, kind: output, shape index: {}]
  %s4 = sld [smem:[#allocation0]]
  $region22: #{neural_net_forward.1} parent=0
    _
  %s6 = ssub.s32 1, %s4
  %s7 = scalar_select 0, %s6, %s4
  // Predicated region
  $region2: #{neural_net_forward.1} parent=0 // pred_check
    _
  $region3: #{neural_net_forward.1} parent=0 // pred_check_branch
    %9 = sbr.rel (0) target = $region5
  $region4: #{neural_net_forward.1} parent=0 // pred_region
    _
  $region5: #{neural_net_forward.1} parent=0 // pred_fallthru
    _
  // Predicated region
  $region6: #{neural_net_forward.1} parent=0 // pred_check
    _
  $region7: #{neural_net_forward.1} parent=0 // pred_check_branch
    %11 = sbr.rel (0) target = $region9
  $region8: #{neural_net_forward.1} parent=0 // pred_region
    _
  $region9: #{neural_net_forward.1} parent=0 // pred_fallthru
    _
  // Predicated region
  $region10: #{neural_net_forward.1} parent=0 // pred_check
    _
  $region11: #{neural_net_forward.1} parent=0 // pred_check_branch
    %13 = sbr.rel (0) target = $region13
  $region12: #{neural_net_forward.1} parent=0 // pred_region
    _
  $region13: #{neural_net_forward.1} parent=0 // pred_fallthru
    _
  %v15 = vld [vmem:[%s0] sm:$0x7]
  %v16 = vld [vmem:[%s1] sm:$0xf]
  %v17 = vld [vmem:[%s1 + $0x4] sm:$0xf]
  %v18 = vld [vmem:[%s1 + $0x8] sm:$0xf]
  %v19 = vld [vmem:[%s1 + $0xc] sm:$0xf]
  %v20 = vld [vmem:[%s1 + $0x10] sm:$0xf]
  %v21 = vld [vmem:[%s1 + $0x14] sm:$0xf]
  %v22 = vld [vmem:[%s1 + $0x18] sm:$0xf]
  %v23 = vld [vmem:[%s1 + $0x1c] sm:$0xf]
  %v24 = vld [vmem:[%s2] sm:$0xff]
  %v25 = vld [vmem:[%s2 + $0x8] sm:$0xff]
  %v26 = vld [vmem:[%s2 + $0x10] sm:$0xff]
  %v27 = vld [vmem:[%s2 + $0x18] sm:$0xff]
  %v28 = vld [vmem:[%s2 + $0x20] sm:$0xff]
  %v29 = vld [vmem:[%s2 + $0x28] sm:$0xff]
  %v30 = vld [vmem:[%s2 + $0x30] sm:$0xff]
  %v31 = vld [vmem:[%s2 + $0x38] sm:$0xff]
  %33 = vset.pattern.permute.xlu0 0
  %34 = vperm.xlu0 %33, %v24
  %v35 = vpop.permute.xlu0 %34
  %38 = vset.pattern.permute.xlu0 0
  %39 = vperm.xlu0 %38, %v25
  %v40 = vpop.permute.xlu0 %39
  %43 = vset.pattern.permute.xlu0 0
  %44 = vperm.xlu0 %43, %v26
  %v45 = vpop.permute.xlu0 %44
  %48 = vset.pattern.permute.xlu0 0
  %49 = vperm.xlu0 %48, %v27
  %v50 = vpop.permute.xlu0 %49
  %53 = vset.pattern.permute.xlu0 0
  %54 = vperm.xlu0 %53, %v28
  %v55 = vpop.permute.xlu0 %54
  %58 = vset.pattern.permute.xlu0 0
  %59 = vperm.xlu0 %58, %v29
  %v60 = vpop.permute.xlu0 %59
  %63 = vset.pattern.permute.xlu0 0
  %64 = vperm.xlu0 %63, %v30
  %v65 = vpop.permute.xlu0 %64
  %68 = vset.pattern.permute.xlu0 0
  %69 = vperm.xlu0 %68, %v31
  %v70 = vpop.permute.xlu0 %69
  %v80 = vunpack.c.l.b16 %v16
  %v81 = vunpack.c.l.b16 %v17
  %v82 = vunpack.c.l.b16 %v18
  %v83 = vunpack.c.l.b16 %v19
  %v84 = vunpack.c.l.b16 %v20
  %v85 = vunpack.c.l.b16 %v21
  %v86 = vunpack.c.l.b16 %v22
  %v87 = vunpack.c.l.b16 %v23
  %v88 = vpack.c.b16 %v81, %v80
  %v89 = vpack.c.b16 %v83, %v82
  %v90 = vpack.c.b16 %v85, %v84
  %v91 = vpack.c.b16 %v87, %v86
  %vm92 = vcmask 39936
  %v94 = vsel %vm92, %v88, 0
  %v97 = vsel %vm92, %v89, 0
  %v100 = vsel %vm92, %v90, 0
  %v103 = vsel %vm92, %v91, 0
  %vm105 = vcmask 1041408
  %vm106 = vcmask 1042432
  %v107 = vsel %vm105, 4294967295, 65535
  %v108 = vsel %vm106, %v107, 0
  %v110 = vand.u32 %v15, %v108
  %112 = vmatprep.subr.bf16.mxu0 0
  %113 = vmatpush1.bf16.msra.mxu0 %v110
  %114 = vmatprep.subr.bf16.mxu0 0
  %115 = vmatpush1.bf16.msra.mxu0 0
  %116 = vmatprep.subr.bf16.mxu0 0
  %117 = vmatpush1.bf16.msra.mxu0 0
  %118 = vmatprep.subr.bf16.mxu0 0
  %119 = vmatpush1.bf16.msra.mxu0 0
  %120 = vmatprep.subr.bf16.mxu0 0
  %121 = vmatpush1.bf16.msra.mxu0 0
  %122 = vmatprep.subr.bf16.mxu0 0
  %123 = vmatpush1.bf16.msra.mxu0 0
  %124 = vmatprep.subr.bf16.mxu0 0
  %125 = vmatpush1.bf16.msra.mxu0 0
  %126 = vmatprep.subr.bf16.mxu0 0
  %127 = vmatpush1.bf16.msra.mxu0 0
  %128 = vmatprep.subr.bf16.mxu0 0
  %129 = vmatpush1.bf16.msra.mxu0 0
  %130 = vmatprep.subr.bf16.mxu0 0
  %131 = vmatpush1.bf16.msra.mxu0 0
  %132 = vmatprep.subr.bf16.mxu0 0
  %133 = vmatpush1.bf16.msra.mxu0 0
  %134 = vmatprep.subr.bf16.mxu0 0
  %135 = vmatpush1.bf16.msra.mxu0 0
  %136 = vmatprep.subr.bf16.mxu0 0
  %137 = vmatpush1.bf16.msra.mxu0 0
  %138 = vmatprep.subr.bf16.mxu0 0
  %139 = vmatpush1.bf16.msra.mxu0 0
  %140 = vmatprep.subr.bf16.mxu0 0
  %141 = vmatpush1.bf16.msra.mxu0 0
  %142 = vmatprep.subr.bf16.mxu0 0
  %143 = vmatpush1.bf16.msra.mxu0 0
  %144 = vmatprep.mubr.bf16.mxu0 0
  %145 = vmatmul.mubr.bf16.gmra.mrb[0].mxu0 %v94
  %v146 = vpop.f32.mrb[0].mxu0
  %v147 = vadd.f32 %v35, %v146
  %v148 = vpop.f32.mrb[0].mxu0
  %v149 = vpop.f32.mrb[0].mxu0
  %v150 = vadd.f32 %v40, %v149
  %v151 = vpop.f32.mrb[0].mxu0
  %152 = vmatprep.mubr.bf16.mxu0 0
  %153 = vmatmul.mubr.bf16.gmra.mrb[0].mxu0 %v97
  %v154 = vpop.f32.mrb[0].mxu0
  %v155 = vadd.f32 %v45, %v154
  %v156 = vpop.f32.mrb[0].mxu0
  %v157 = vpop.f32.mrb[0].mxu0
  %v158 = vadd.f32 %v50, %v157
  %v159 = vpop.f32.mrb[0].mxu0
  %160 = vmatprep.mubr.bf16.mxu0 0
  %161 = vmatmul.mubr.bf16.gmra.mrb[0].mxu0 %v100
  %v162 = vpop.f32.mrb[0].mxu0
  %v163 = vadd.f32 %v55, %v162
  %v164 = vpop.f32.mrb[0].mxu0
  %v165 = vpop.f32.mrb[0].mxu0
  %v166 = vadd.f32 %v60, %v165
  %v167 = vpop.f32.mrb[0].mxu0
  %168 = vmatprep.mubr.bf16.mxu0 0
  %169 = vmatmul.mubr.bf16.gmra.mrb[0].mxu0 %v103
  %v170 = vpop.f32.mrb[0].mxu0
  %v171 = vadd.f32 %v65, %v170
  %v172 = vpop.f32.mrb[0].mxu0
  %v173 = vpop.f32.mrb[0].mxu0
  %v174 = vadd.f32 %v70, %v173
  %v175 = vpop.f32.mrb[0].mxu0
  %176 = vdwg.mxu0
  %v177 = vmax.f32 %v147, 0.0
  %v178 = vmax.f32 %v150, 0.0
  %v179 = vmax.f32 %v155, 0.0
  %v180 = vmax.f32 %v158, 0.0
  %v181 = vmax.f32 %v163, 0.0
  %v182 = vmax.f32 %v166, 0.0
  %v183 = vmax.f32 %v171, 0.0
  %v184 = vmax.f32 %v174, 0.0
  %v185 = vpack.c.bf16 %v178, %v177
  %v186 = vpack.c.bf16 %v180, %v179
  %v187 = vpack.c.bf16 %v182, %v181
  %v188 = vpack.c.bf16 %v184, %v183
  %v189 = vld [vmem:[%s1 + $0x20] sm:$0xf]
  %v190 = vld [vmem:[%s1 + $0x24] sm:$0xf]
  %v191 = vld [vmem:[%s1 + $0x28] sm:$0xf]
  %v192 = vld [vmem:[%s1 + $0x2c] sm:$0xf]
  %v193 = vld [vmem:[%s2] sm:$0xff]
  %v194 = vld [vmem:[%s2 + $0x8] sm:$0xff]
  %v195 = vld [vmem:[%s2 + $0x10] sm:$0xff]
  %v196 = vld [vmem:[%s2 + $0x18] sm:$0xff]
  %198 = vset.pattern.permute.xlu0 1
  %199 = vperm.xlu0 %198, %v193
  %v200 = vpop.permute.xlu0 %199
  %203 = vset.pattern.permute.xlu0 1
  %204 = vperm.xlu0 %203, %v194
  %v205 = vpop.permute.xlu0 %204
  %208 = vset.pattern.permute.xlu0 1
  %209 = vperm.xlu0 %208, %v195
  %v210 = vpop.permute.xlu0 %209
  %213 = vset.pattern.permute.xlu0 1
  %214 = vperm.xlu0 %213, %v196
  %v215 = vpop.permute.xlu0 %214
  %v221 = vunpack.c.l.b16 %v189
  %v222 = vunpack.c.l.b16 %v190
  %v223 = vunpack.c.l.b16 %v191
  %v224 = vunpack.c.l.b16 %v192
  %v225 = vpack.c.b16 %v222, %v221
  %v226 = vpack.c.b16 %v224, %v223
  %vm227 = vcmask 523264
  %v229 = vsel %vm227, %v225, 0
  %v232 = vsel %vm227, %v226, 0
  %234 = vmatprep.subr.bf16.mxu0 0
  %235 = vmatpush1.bf16.msra.mxu0 %v185
  %236 = vmatprep.subr.bf16.mxu0 0
  %237 = vmatpush1.bf16.msra.mxu0 %v186
  %238 = vmatprep.subr.bf16.mxu0 0
  %239 = vmatpush1.bf16.msra.mxu0 %v187
  %240 = vmatprep.subr.bf16.mxu0 0
  %241 = vmatpush1.bf16.msra.mxu0 %v188
  %242 = vmatprep.subr.bf16.mxu0 0
  %243 = vmatpush1.bf16.msra.mxu0 0
  %244 = vmatprep.subr.bf16.mxu0 0
  %245 = vmatpush1.bf16.msra.mxu0 0
  %246 = vmatprep.subr.bf16.mxu0 0
  %247 = vmatpush1.bf16.msra.mxu0 0
  %248 = vmatprep.subr.bf16.mxu0 0
  %249 = vmatpush1.bf16.msra.mxu0 0
  %250 = vmatprep.subr.bf16.mxu0 0
  %251 = vmatpush1.bf16.msra.mxu0 0
  %252 = vmatprep.subr.bf16.mxu0 0
  %253 = vmatpush1.bf16.msra.mxu0 0
  %254 = vmatprep.subr.bf16.mxu0 0
  %255 = vmatpush1.bf16.msra.mxu0 0
  %256 = vmatprep.subr.bf16.mxu0 0
  %257 = vmatpush1.bf16.msra.mxu0 0
  %258 = vmatprep.subr.bf16.mxu0 0
  %259 = vmatpush1.bf16.msra.mxu0 0
  %260 = vmatprep.subr.bf16.mxu0 0
  %261 = vmatpush1.bf16.msra.mxu0 0
  %262 = vmatprep.subr.bf16.mxu0 0
  %263 = vmatpush1.bf16.msra.mxu0 0
  %264 = vmatprep.subr.bf16.mxu0 0
  %265 = vmatpush1.bf16.msra.mxu0 0
  %266 = vmatprep.mubr.bf16.mxu0 0
  %267 = vmatmul.mubr.bf16.gmra.mrb[0].mxu0 %v229
  %v268 = vpop.f32.mrb[0].mxu0
  %v269 = vadd.f32 %v200, %v268
  %v270 = vpop.f32.mrb[0].mxu0
  %v271 = vpop.f32.mrb[0].mxu0
  %v272 = vadd.f32 %v205, %v271
  %v273 = vpop.f32.mrb[0].mxu0
  %274 = vmatprep.mubr.bf16.mxu0 0
  %275 = vmatmul.mubr.bf16.gmra.mrb[0].mxu0 %v232
  %v276 = vpop.f32.mrb[0].mxu0
  %v277 = vadd.f32 %v210, %v276
  %v278 = vpop.f32.mrb[0].mxu0
  %v279 = vpop.f32.mrb[0].mxu0
  %v280 = vadd.f32 %v215, %v279
  %v281 = vpop.f32.mrb[0].mxu0
  %282 = vdwg.mxu0
  %v283 = vtanh.pop %v269
  %v284 = vtanh.pop %v272
  %v285 = vtanh.pop %v277
  %v286 = vtanh.pop %v280
  %v287 = vpack.c.bf16 %v284, %v283
  %v288 = vpack.c.bf16 %v286, %v285
  %v289 = vld [vmem:[%s1 + $0x30] sm:$0xf]
  %v290 = vld [vmem:[%s1 + $0x34] sm:$0xf]
  %v291 = vld [vmem:[%s2] sm:$0xff]
  %v292 = vld [vmem:[%s2 + $0x8] sm:$0xff]
  %294 = vset.pattern.permute.xlu0 2
  %295 = vperm.xlu0 %294, %v291
  %v296 = vpop.permute.xlu0 %295
  %299 = vset.pattern.permute.xlu0 2
  %300 = vperm.xlu0 %299, %v292
  %v301 = vpop.permute.xlu0 %300
  %v305 = vunpack.c.l.b16 %v289
  %v306 = vunpack.c.l.b16 %v290
  %v307 = vpack.c.b16 %v306, %v305
  %vm308 = vcmask 261120
  %v310 = vsel %vm308, %v307, 0
  %312 = vmatprep.subr.bf16.mxu0 0
  %313 = vmatpush1.bf16.msra.mxu0 %v287
  %314 = vmatprep.subr.bf16.mxu0 0
  %315 = vmatpush1.bf16.msra.mxu0 %v288
  %316 = vmatprep.subr.bf16.mxu0 0
  %317 = vmatpush1.bf16.msra.mxu0 0
  %318 = vmatprep.subr.bf16.mxu0 0
  %319 = vmatpush1.bf16.msra.mxu0 0
  %320 = vmatprep.subr.bf16.mxu0 0
  %321 = vmatpush1.bf16.msra.mxu0 0
  %322 = vmatprep.subr.bf16.mxu0 0
  %323 = vmatpush1.bf16.msra.mxu0 0
  %324 = vmatprep.subr.bf16.mxu0 0
  %325 = vmatpush1.bf16.msra.mxu0 0
  %326 = vmatprep.subr.bf16.mxu0 0
  %327 = vmatpush1.bf16.msra.mxu0 0
  %328 = vmatprep.subr.bf16.mxu0 0
  %329 = vmatpush1.bf16.msra.mxu0 0
  %330 = vmatprep.subr.bf16.mxu0 0
  %331 = vmatpush1.bf16.msra.mxu0 0
  %332 = vmatprep.subr.bf16.mxu0 0
  %333 = vmatpush1.bf16.msra.mxu0 0
  %334 = vmatprep.subr.bf16.mxu0 0
  %335 = vmatpush1.bf16.msra.mxu0 0
  %336 = vmatprep.subr.bf16.mxu0 0
  %337 = vmatpush1.bf16.msra.mxu0 0
  %338 = vmatprep.subr.bf16.mxu0 0
  %339 = vmatpush1.bf16.msra.mxu0 0
  %340 = vmatprep.subr.bf16.mxu0 0
  %341 = vmatpush1.bf16.msra.mxu0 0
  %342 = vmatprep.subr.bf16.mxu0 0
  %343 = vmatpush1.bf16.msra.mxu0 0
  %344 = vmatprep.mubr.bf16.mxu0 0
  %345 = vmatmul.mubr.bf16.gmra.mrb[0].mxu0 %v310
  %v346 = vpop.f32.mrb[0].mxu0
  %v347 = vadd.f32 %v296, %v346
  %v348 = vpop.f32.mrb[0].mxu0
  %v349 = vpop.f32.mrb[0].mxu0
  %v350 = vadd.f32 %v301, %v349
  %v351 = vpop.f32.mrb[0].mxu0
  %352 = vdwg.mxu0
  %vm353 = vcmp.ge.f32.partialorder %v347, 0.0
  %vm354 = vcmp.ge.f32.partialorder %v350, 0.0
  %v355 = vmul.f32 %v347, 0.01
  %v356 = vmul.f32 %v350, 0.01
  %v357 = vsel %vm353, %v347, %v355
  %v358 = vsel %vm354, %v350, %v356
  %v359 = vld [vmem:[%s2] sm:$0x1]
  %360 = vset.pattern.permute.xlu0 3
  %361 = vperm.xlu0 %360, %v291
  %v362 = vpop.permute.xlu0 %361
  %364 = vset.pattern.permute.xlu0 3
  %365 = vperm.xlu0 %364, %v292
  %v366 = vpop.permute.xlu0 %365
  %v368 = vmul.f32 %v362, %v357
  %v369 = vmul.f32 %v366, %v358
  %v370 = vadd.f32 %v368, %v369
  %v371 = vrot.slane %v370, 4
  %v372 = vadd.f32 %v370, %v371
  %v373 = vrot.slane %v372, 2
  %v374 = vadd.f32 %v372, %v373
  %v375 = vrot.slane %v374, 1
  %v376 = vadd.f32 %v374, %v375
  %378 = vset.pattern.permute.xlu0 4
  %379 = vperm.xlu0 %378, %v359
  %v380 = vpop.permute.xlu0 %379
  %v382 = vadd.f32 %v376, %v380
  %v383 = vxor.u32 %v382, 2147483648
  %v384 = vmul.f32 %v383, 1.442695
  %v385 = vpow.pop %v384
  %v386 = vadd.f32 %v385, 1.0
  %v387 = vrcp.pop %v386
  %v388 = vmul.f32 1.0, %v387
  %389 = vst [vmem:[%s3] sm:$0x1] %v388
  // Predicated region
  $region14: #{neural_net_forward.1} parent=0 // pred_check
    _
  $region15: #{neural_net_forward.1} parent=0 // pred_check_branch
    %391 = sbr.rel (0) target = $region17
  $region16: #{neural_net_forward.1} parent=0 // pred_region
    _
  $region17: #{neural_net_forward.1} parent=0 // pred_fallthru
    _
  // Predicated region
  $region18: #{neural_net_forward.1} parent=0 // pred_check
    _
  $region19: #{neural_net_forward.1} parent=0 // pred_check_branch
    %393 = sbr.rel (0) target = $region21
  $region20: #{neural_net_forward.1} parent=0 // pred_region
    _
  $region21: #{neural_net_forward.1} parent=0 // pred_fallthru
    _

</llo_original>
